<compile_context>
chip_gen: v7x
topology: tpu7x:2x2x1
jax: 0.10.0
libtpu: 0.0.40
codegen_flags: <defaults>
</compile_context>

<pallas_src>
import math

import jax
import jax.numpy as jnp
from jax import lax
from jax.experimental import pallas as pl
from jax.experimental.pallas import tpu as pltpu

EPS = 1e-8
SCALE_INIT = 1.0

_POINTS_PER_SLAB_ROW = 128
_SLAB_LANES = 3 * _POINTS_PER_SLAB_ROW   # 384 lanes = 3 full vregs per row


def _round_up(x: int, m: int) -> int:
    return ((x + m - 1) // m) * m


def _cdiv(a: int, b: int) -> int:
    return (a + b - 1) // b


# ----------------------------------------------------------------------------
# Lane-dense slab kernel (production path for D == 3).
# Tile = (TM, 384) slab of the flat coord buffer; lane k of a row holds
# coordinate (k % 3) of point (k // 3).  384 % 3 == 0, so circular rolls wrap
# on a point boundary and every row starts at a point boundary.
# ----------------------------------------------------------------------------
def _coors_norm_slab3_kernel(scale_ref, x_ref, o_ref):
    x = x_ref[...]                                    # (TM, 384), full-width vld
    if x.dtype != jnp.float32:
        x = x.astype(jnp.float32)                     # f32 VPU/EUP (required on v5e)
    sq = x * x

    # s[k] = sq[k] + sq[k-1] + sq[k-2]  ->  full |p|^2 at lanes k % 3 == 2.
    s = sq + pltpu.roll(sq, shift=1, axis=1) + pltpu.roll(sq, shift=2, axis=1)

    # coors / max(|coors|, eps) * scale == coors * rsqrt(max(|coors|^2, eps^2)) * scale
    inv = lax.rsqrt(jnp.maximum(s, EPS * EPS)) * scale_ref[0]

    # Broadcast inv from lane 3p+2 back to lanes 3p and 3p+1 (rolls by -1/-2
    # expressed with non-negative shifts).
    inv_p1 = pltpu.roll(inv, shift=_SLAB_LANES - 1, axis=1)   # inv[k + 1]
    inv_p2 = pltpu.roll(inv, shift=_SLAB_LANES - 2, axis=1)   # inv[k + 2]
    lane3 = lax.broadcasted_iota(jnp.int32, (1, _SLAB_LANES), 1) % 3
    inv_b = jnp.where(lane3 == 2, inv, jnp.where(lane3 == 1, inv_p1, inv_p2))

    o_ref[...] = (x * inv_b).astype(o_ref.dtype)      # full-width unmasked vst


# ----------------------------------------------------------------------------
# Generic row-tiled fallback (D != 3).  Unrolled squared sum for small D.
# ----------------------------------------------------------------------------
def _coors_norm_rows_kernel(scale_ref, x_ref, o_ref):
    x = x_ref[...]                                   # (TM, D)
    if x.dtype != jnp.float32:
        x = x.astype(jnp.float32)
    D = x.shape[-1]
    if D <= 8:
        sq = x[:, 0:1] * x[:, 0:1]
        for d in range(1, D):
            xd = x[:, d:d + 1]
            sq = sq + xd * xd                        # pure VPU, no 128-lane reduce
    else:
        sq = jnp.sum(x * x, axis=-1, keepdims=True)
    inv = lax.rsqrt(jnp.maximum(sq, EPS * EPS)) * scale_ref[0]
    o_ref[...] = (x * inv).astype(o_ref.dtype)


def _coors_norm_rows(coors: jax.Array, scale: jax.Array, *, block_rows: int = 2048) -> jax.Array:
    orig_shape = coors.shape
    D = orig_shape[-1]
    R = math.prod(orig_shape[:-1]) if len(orig_shape) > 1 else 1
    x2d = coors.reshape(R, D)
    tm = R if R <= block_rows else block_rows
    grid = (_cdiv(R, tm),)

    itemsize = jnp.dtype(coors.dtype).itemsize
    cost = pl.CostEstimate(flops=5 * R * D, transcendentals=R,
                           bytes_accessed=2 * R * D * itemsize)

    out = pl.pallas_call(
        _coors_norm_rows_kernel,
        out_shape=jax.ShapeDtypeStruct((R, D), coors.dtype),
        grid=grid,
        in_specs=[
            pl.BlockSpec(memory_space=pltpu.MemorySpace.SMEM),   # scale (scalar param)
            pl.BlockSpec((tm, D), lambda i: (i, 0)),
        ],
        out_specs=pl.BlockSpec((tm, D), lambda i: (i, 0)),
        compiler_params=pltpu.CompilerParams(dimension_semantics=("parallel",)),
        cost_estimate=cost,
    )(scale, x2d)
    return out.reshape(orig_shape)


# ----------------------------------------------------------------------------
# Drop-in CoorsNorm forward for (..., D) coords (norm over dim=-1).
# ----------------------------------------------------------------------------
def coors_norm(coors: jax.Array, scale: jax.Array, *,
               block_rows: int = 1024, min_block_rows: int = 512,
               buffers: int | None = None) -> jax.Array:
    """CoorsNorm forward.  coors: (..., D); scale: (1,) parameter.

    D == 3 uses the lane-dense slab kernel (full-width loads/stores, dense
    DMA, XLU rolls for the 3-lane reduce/broadcast).  D != 3 falls back to a
    row-tiled kernel.  `buffers=3` requests deeper pipelining (v7x).
    """
    orig_shape = coors.shape
    D = orig_shape[-1]
    if D != 3:
        return _coors_norm_rows(coors, scale)

    F = math.prod(orig_shape)
    L = _SLAB_LANES
    pad = (-F) % L
    flat = coors.reshape(F)
    if pad:
        # TODO(synk): when the point count is not a multiple of 128 this
        # pad/slice costs one extra HBM round-trip; keep point counts a
        # multiple of 128 (or fuse CoorsNorm into the EGNN layer) to avoid it.
        flat = jnp.pad(flat, (0, pad))
    M = (F + pad) // L
    slab = flat.reshape(M, L)

    # Tile sizing: ~0.75-1.5 MiB/buffer per step to amortise per-step
    # overhead, but split into >= ~8 steps once there is enough work so both
    # v7x TensorCores (and the DMA pipeline) stay busy.  Padded footprint ==
    # logical footprint here (slab is fully dense).
    if M <= min_block_rows:
        tm = M                                        # single full-extent block
    else:
        tm = min(block_rows, max(min_block_rows, _round_up(_cdiv(M, 8), 8)))
    grid = (_cdiv(M, tm),)

    itemsize = jnp.dtype(coors.dtype).itemsize
    cost = pl.CostEstimate(flops=5 * F, transcendentals=F // 3,
                           bytes_accessed=2 * (F + pad) * itemsize)

    block_kwargs = {}
    if buffers is not None:
        block_kwargs["pipeline_mode"] = pl.Buffered(buffers)     # e.g. 3 on v7x

    out = pl.pallas_call(
        _coors_norm_slab3_kernel,
        out_shape=jax.ShapeDtypeStruct((M, L), coors.dtype),
        grid=grid,
        in_specs=[
            pl.BlockSpec(memory_space=pltpu.MemorySpace.SMEM),   # scale (scalar param)
            pl.BlockSpec((tm, L), lambda i: (i, 0), **block_kwargs),
        ],
        out_specs=pl.BlockSpec((tm, L), lambda i: (i, 0), **block_kwargs),
        compiler_params=pltpu.CompilerParams(dimension_semantics=("parallel",)),
        cost_estimate=cost,
    )(scale, slab)

    out_flat = out.reshape(F + pad)
    if pad:
        out_flat = out_flat[:F]
    return out_flat.reshape(orig_shape)


# ----------------------------------------------------------------------------
# Lane-dense kernel for stacks that carry coords as (B, D, N) (points on the
# lane axis).  Blocks multiple batches per grid step.
# ----------------------------------------------------------------------------
def _coors_norm_bdn_kernel(scale_ref, x_ref, o_ref):
    x = x_ref[...]                                   # (TB, D, TN)
    if x.dtype != jnp.float32:
        x = x.astype(jnp.float32)
    D = x.shape[1]
    sq = x[:, 0:1, :] * x[:, 0:1, :]
    for d in range(1, D):
        xd = x[:, d:d + 1, :]
        sq = sq + xd * xd                            # (TB, 1, TN), pure VPU
    inv = lax.rsqrt(jnp.maximum(sq, EPS * EPS)) * scale_ref[0]
    o_ref[...] = (x * inv).astype(o_ref.dtype)       # broadcast over the D sublanes


def coors_norm_lane_dense(coors_t: jax.Array, scale: jax.Array, *,
                          block_batches: int = 8, block_cols: int = 8192,
                          buffers: int | None = None) -> jax.Array:
    """CoorsNorm for (B, D, N)-layout coords (norm over the middle D axis)."""
    B, D, N = coors_t.shape
    tb = B if B <= block_batches else block_batches
    tn = N if N <= block_cols else block_cols
    grid = (_cdiv(B, tb), _cdiv(N, tn))

    itemsize = jnp.dtype(coors_t.dtype).itemsize
    cost = pl.CostEstimate(flops=5 * B * D * N, transcendentals=B * N,
                           bytes_accessed=2 * B * D * N * itemsize)

    block_kwargs = {}
    if buffers is not None:
        block_kwargs["pipeline_mode"] = pl.Buffered(buffers)

    return pl.pallas_call(
        _coors_norm_bdn_kernel,
        out_shape=jax.ShapeDtypeStruct((B, D, N), coors_t.dtype),
        grid=grid,
        in_specs=[
            pl.BlockSpec(memory_space=pltpu.MemorySpace.SMEM),
            pl.BlockSpec((tb, D, tn), lambda b, n: (b, 0, n), **block_kwargs),
        ],
        out_specs=pl.BlockSpec((tb, D, tn), lambda b, n: (b, 0, n), **block_kwargs),
        compiler_params=pltpu.CompilerParams(
            dimension_semantics=("parallel", "parallel")),
        cost_estimate=cost,
    )(scale, coors_t)


# ----------------------------------------------------------------------------
# Pure-JAX reference matching the PyTorch forward.
# ----------------------------------------------------------------------------
def coors_norm_ref(coors: jax.Array, scale: jax.Array) -> jax.Array:
    norm = jnp.linalg.norm(coors, axis=-1, keepdims=True)
    normed = coors / jnp.maximum(norm, EPS)
    return normed * scale[0]


if __name__ == "__main__":
    key = jax.random.PRNGKey(0)
    B, N, D = 2, 8, 3  # (batch, num_points, coord_dim) as EGNN coors
    coors = jax.random.normal(key, (B, N, D), dtype=jnp.float32)

    # Parameter init per module __init__: scale = full((1,), scale_init)
    scale = jnp.full((1,), SCALE_INIT, dtype=jnp.float32)

    # 1) Tiny drop-in case (a standalone call can't win at this size; it is
    #    a correctness smoke test of the slab path).
    ref = coors_norm_ref(coors, scale)
    out = jax.block_until_ready(coors_norm(coors, scale))
    assert out.shape == (B, N, D)
    assert jnp.allclose(out, ref, atol=1e-5, rtol=1e-5), "slab kernel mismatch (tiny)"

    # 2) Point count not a multiple of 128 (exercises the pad/slice path).
    c2 = jax.random.normal(jax.random.PRNGKey(1), (4, 1000, 3), dtype=jnp.float32)
    o2 = jax.block_until_ready(coors_norm(c2, scale))
    assert jnp.allclose(o2, coors_norm_ref(c2, scale), atol=1e-5, rtol=1e-5), \
        "slab kernel mismatch (padded tail)"

    # 3) Larger input -> multi-step grid (>= 2 tiles, parallel axis).
    c3 = jax.random.normal(jax.random.PRNGKey(2), (16, 8192, 3), dtype=jnp.float32)
    o3 = jax.block_until_ready(coors_norm(c3, scale))
    assert jnp.allclose(o3, coors_norm_ref(c3, scale), atol=1e-5, rtol=1e-5), \
        "slab kernel mismatch (multi-tile)"

    # 4) (B, D, N) lane-dense path with multi-batch blocks.
    c4 = jnp.transpose(c2, (0, 2, 1))                 # (4, 3, 1000)
    o4 = jax.block_until_ready(coors_norm_lane_dense(c4, scale))
    assert jnp.allclose(o4, jnp.transpose(coors_norm_ref(c2, scale), (0, 2, 1)),
                        atol=1e-5, rtol=1e-5), "lane-dense (B,D,N) kernel mismatch"

    # 5) D != 3 generic fallback.
    c5 = jax.random.normal(jax.random.PRNGKey(3), (2, 8, 4), dtype=jnp.float32)
    o5 = jax.block_until_ready(coors_norm(c5, scale))
    assert jnp.allclose(o5, coors_norm_ref(c5, scale), atol=1e-5, rtol=1e-5), \
        "row fallback kernel mismatch"

    print("KERNEL_OK")
</pallas_src>

<mosaic_0001>
module attributes {stable_mosaic.version = 11 : i64} {
  func.func @_coors_norm_slab3_kernel(%arg0: i32, %arg1: memref<1xf32, #tpu.memory_space<smem>>, %arg2: memref<1x384xf32, #tpu.memory_space<vmem>>, %arg3: memref<1x384xf32, #tpu.memory_space<vmem>>) attributes {dimension_semantics = [#tpu.dimension_semantics<parallel>], iteration_bounds = array<i64: 1>, scalar_prefetch = 0 : i64, scratch_operands = 0 : i64, tpu.core_type = #tpu.core_type<tc>, window_params = [{transform_indices = @transform_0, window_bounds = array<i64: 1>}, {transform_indices = @transform_1, window_bounds = array<i64: 1, 384>}, {transform_indices = @transform_2, window_bounds = array<i64: 1, 384>}]} {
    %c0 = arith.constant 0 : index
    %c0_0 = arith.constant 0 : index
    %0 = vector.load %arg2[%c0, %c0_0] : memref<1x384xf32, #tpu.memory_space<vmem>>, vector<1x384xf32>
    %1 = arith.mulf %0, %0 : vector<1x384xf32>
    %c1_i32 = arith.constant 1 : i32
    %2 = tpu.dynamic_rotate %1 by %c1_i32 dim 1 : vector<1x384xf32>, i32 -> vector<1x384xf32>
    %3 = arith.addf %1, %2 : vector<1x384xf32>
    %c2_i32 = arith.constant 2 : i32
    %4 = tpu.dynamic_rotate %1 by %c2_i32 dim 1 : vector<1x384xf32>, i32 -> vector<1x384xf32>
    %5 = arith.addf %3, %4 : vector<1x384xf32>
    %cst = arith.constant 1.000000e-16 : f32
    %6 = vector.broadcast %cst : f32 to vector<1x384xf32>
    %7 = arith.maximumf %5, %6 : vector<1x384xf32>
    %8 = math.rsqrt %7 : vector<1x384xf32>
    %c0_1 = arith.constant 0 : index
    %9 = memref.load %arg1[%c0_1] : memref<1xf32, #tpu.memory_space<smem>>
    %10 = vector.broadcast %9 : f32 to vector<1x384xf32>
    %11 = arith.mulf %8, %10 : vector<1x384xf32>
    %c383_i32 = arith.constant 383 : i32
    %12 = tpu.dynamic_rotate %11 by %c383_i32 dim 1 : vector<1x384xf32>, i32 -> vector<1x384xf32>
    %c382_i32 = arith.constant 382 : i32
    %13 = tpu.dynamic_rotate %11 by %c382_i32 dim 1 : vector<1x384xf32>, i32 -> vector<1x384xf32>
    %14 = tpu.iota {dimensions = array<i32: 1>} : vector<1x384xi32>
    %c3_i32 = arith.constant 3 : i32
    %c0_i32 = arith.constant 0 : i32
    %15 = arith.cmpi eq, %c3_i32, %c0_i32 : i32
    %c1_i32_2 = arith.constant 1 : i32
    %16 = arith.select %15, %c1_i32_2, %c3_i32 : i32
    %17 = vector.broadcast %16 : i32 to vector<1x384xi32>
    %18 = arith.remsi %14, %17 : vector<1x384xi32>
    %c0_i32_3 = arith.constant 0 : i32
    %19 = vector.broadcast %c0_i32_3 : i32 to vector<1x384xi32>
    %20 = arith.cmpi ne, %18, %19 : vector<1x384xi32>
    %c0_i32_4 = arith.constant 0 : i32
    %21 = vector.broadcast %c0_i32_4 : i32 to vector<1x384xi32>
    %22 = arith.cmpi slt, %18, %21 : vector<1x384xi32>
    %c0_i32_5 = arith.constant 0 : i32
    %23 = arith.cmpi slt, %16, %c0_i32_5 : i32
    %24 = vector.broadcast %23 : i1 to vector<1x384xi1>
    %25 = vector.broadcast %24 : vector<1x384xi1> to vector<1x384xi1>
    %26 = arith.xori %22, %25 : vector<1x384xi1>
    %27 = arith.andi %26, %20 : vector<1x384xi1>
    %28 = vector.broadcast %16 : i32 to vector<1x384xi32>
    %29 = arith.addi %18, %28 : vector<1x384xi32>
    %30 = arith.select %27, %29, %18 : vector<1x384xi1>, vector<1x384xi32>
    %c2_i32_6 = arith.constant 2 : i32
    %31 = vector.broadcast %c2_i32_6 : i32 to vector<1x384xi32>
    %32 = arith.cmpi eq, %30, %31 : vector<1x384xi32>
    %c1_i32_7 = arith.constant 1 : i32
    %33 = vector.broadcast %c1_i32_7 : i32 to vector<1x384xi32>
    %34 = arith.cmpi eq, %30, %33 : vector<1x384xi32>
    %35 = arith.select %34, %12, %13 : vector<1x384xi1>, vector<1x384xf32>
    %36 = arith.select %32, %11, %35 : vector<1x384xi1>, vector<1x384xf32>
    %37 = arith.mulf %0, %36 : vector<1x384xf32>
    %c0_8 = arith.constant 0 : index
    %c0_9 = arith.constant 0 : index
    %38 = vector.load %arg3[%c0_8, %c0_9] : memref<1x384xf32, #tpu.memory_space<vmem>>, vector<1x384xf32>
    tpu.vector_store %arg3[%c0_8, %c0_9], %37 {strides = array<i32>} : memref<1x384xf32, #tpu.memory_space<vmem>>, vector<1x384xf32>,
    return
  }
  func.func @transform_0(%arg0: i32) -> i32 {
    %c0_i32 = arith.constant 0 : i32
    %c0_i32_0 = arith.constant 0 : i32
    return %c0_i32 : i32
  }
  func.func @transform_1(%arg0: i32) -> (i32, i32) {
    %c0_i32 = arith.constant 0 : i32
    %c0_i32_0 = arith.constant 0 : i32
    return %arg0, %c0_i32 : i32, i32
  }
  func.func @transform_2(%arg0: i32) -> (i32, i32) {
    %c0_i32 = arith.constant 0 : i32
    %c0_i32_0 = arith.constant 0 : i32
    return %arg0, %c0_i32 : i32, i32
  }
}

</mosaic_0001>

<llo_original>
// kernel: tpu_custom_call.1
$region0: #{tpu_custom_call.1}
  #allocation0 [shape = 'u32[]', space=smem, size = 0x4, offset = 0x4, fixed_abs, tag = 'smem constant byte address 0x4 - core index']
  #allocation1 [shape = 'u32[144,128]{1,0:T(1,128)}', space=vmem, size = 0x12000, scoped, tag = 'internal scratch']
  #allocation2 [shape = 'f32[1]{0:T(128)S(6)}', space=smem, size = 0x200, scoped, tag = 'scoped memory for tpu_custom_call.1']
  %s0 = inlined_call_operand.<no memory space> [shape: f32[1], index: 0, kind: input, shape index: {}]
  %s1 = inlined_call_operand.vmem [shape: f32[1,384], index: 1, kind: input, shape index: {}]
  %s2 = inlined_call_operand.hbm [shape: f32[1,384], index: 2, kind: output, shape index: {}]
  %s3 = sld [smem:[#allocation0]]
  $region18: #{tpu_custom_call.1} parent=0
    _
  %s5 = ssub.s32 1, %s3
  %s6 = scalar_select 0, %s5, %s3
  %7 = sst [smem:[#allocation2]] %s0
  $region1: #{tpu_custom_call.1} parent=0
    #allocation3 [shape = 'u8[1536]{0}', space=vmem, size = 0x800, scoped, tag = 'output window, operand 0, single buffered']
    #allocation4 [shape = 's32[1]{0}', space=sflag, size = 0x4, scoped, tag = 'scoped memory for tpu_custom_call.1']
    %8 = vsyncpa [#allocation4], 0
    // Predicated region
    $region2: #{tpu_custom_call.1} parent=1 // pred_check
      _
    $region3: #{tpu_custom_call.1} parent=1 // pred_check_branch
      %10 = sbr.rel (0) target = $region5
    $region4: #{tpu_custom_call.1} parent=1 // pred_region
      _
    $region5: #{tpu_custom_call.1} parent=1 // pred_fallthru
      _
    // Predicated region
    $region6: #{tpu_custom_call.1} parent=1 // pred_check
      _
    $region7: #{tpu_custom_call.1} parent=1 // pred_check_branch
      %12 = sbr.rel (0) target = $region9
    $region8: #{tpu_custom_call.1} parent=1 // pred_region
      _
    $region9: #{tpu_custom_call.1} parent=1 // pred_fallthru
      _
    %v13 = vld [vmem:[%s1] sm:$0x7]
    %v14 = vmul.f32 %v13, %v13
    %v16 = vlaneseq
    %v17 = vshrl.u32 %v16, 7
    %v18 = vsub.s32 0, %v17
    %v19 = vrot.slane %v14, %v18
    %v20 = vlaneseq
    %v21 = vshrl.u32 %v20, 7
    %v22 = vsub.s32 1, %v21
    %v23 = vrot.slane %v14, %v22
    %v24 = vlaneseq
    %v25 = vshrl.u32 %v24, 7
    %v26 = vsub.s32 2, %v25
    %v27 = vrot.slane %v14, %v26
    %31 = vrot.lane.b32.xlu0 %v19, 1
    %v32 = vpop.permute.xlu0 %31
    %33 = vrot.lane.b32.xlu0 %v23, 1
    %v34 = vpop.permute.xlu0 %33
    %35 = vrot.lane.b32.xlu0 %v27, 1
    %v36 = vpop.permute.xlu0 %35
    %v37 = vlaneseq
    %v38 = vand.u32 %v37, 127
    %vm39 = vcmp.lt.s32.totalorder %v38, 1
    %v40 = vsel %vm39, %v34, %v36
    %v41 = vsel %vm39, %v32, %v34
    %v42 = vsel %vm39, %v36, %v32
    %v46 = vcombine.low %v42, %v41
    %v48 = vunpack.c.l.s4 1966171168
    %v49 = vunpack.c.0.s8 %v48
    %v50 = vlaneseq
    %v51 = vshrl.u32 %v50, 7
    %v52 = vsub.s32 %v49, %v51
    %v53 = vrot.slane %v46, %v52
    %v55 = vunpack.c.l.s4 1966171168
    %v56 = vunpack.c.0.s8 %v55
    %v57 = vlaneseq
    %v58 = vshrl.u32 %v57, 7
    %v59 = vsub.s32 %v56, %v58
    %v60 = vrot.slane %v40, %v59
    %v61 = vcombine.low %v53, %v60
    %v63 = vunpack.c.l.s4 1966171168
    %v64 = vunpack.c.0.s8 %v63
    %v65 = vlaneseq
    %v66 = vshrl.u32 %v65, 7
    %v67 = vsub.s32 %v64, %v66
    %v68 = vrot.slane %v61, %v67
    %v70 = vadd.f32 %v14, %v68
    %71 = vrot.lane.b32.xlu0 %v19, 2
    %v72 = vpop.permute.xlu0 %71
    %73 = vrot.lane.b32.xlu0 %v23, 2
    %v74 = vpop.permute.xlu0 %73
    %75 = vrot.lane.b32.xlu0 %v27, 2
    %v76 = vpop.permute.xlu0 %75
    %vm77 = vcmp.lt.s32.totalorder %v38, 2
    %v78 = vsel %vm77, %v74, %v76
    %v79 = vsel %vm77, %v72, %v74
    %v80 = vsel %vm77, %v76, %v72
    %v84 = vcombine.low %v80, %v79
    %v86 = vunpack.c.l.s4 1966171168
    %v87 = vunpack.c.0.s8 %v86
    %v88 = vlaneseq
    %v89 = vshrl.u32 %v88, 7
    %v90 = vsub.s32 %v87, %v89
    %v91 = vrot.slane %v84, %v90
    %v93 = vunpack.c.l.s4 1966171168
    %v94 = vunpack.c.0.s8 %v93
    %v95 = vlaneseq
    %v96 = vshrl.u32 %v95, 7
    %v97 = vsub.s32 %v94, %v96
    %v98 = vrot.slane %v78, %v97
    %v99 = vcombine.low %v91, %v98
    %v101 = vunpack.c.l.s4 1966171168
    %v102 = vunpack.c.0.s8 %v101
    %v103 = vlaneseq
    %v104 = vshrl.u32 %v103, 7
    %v105 = vsub.s32 %v102, %v104
    %v106 = vrot.slane %v99, %v105
    %v108 = vadd.f32 %v70, %v106
    %v109 = vmax.f32 %v108, 1e-16
    %v110 = vrsqrt.pop %v109
    %s111 = sld [smem:[#allocation2]]
    %v112 = vstv %s111
    %v113 = vmul.f32 %v110, %v112
    %v115 = vlaneseq
    %v116 = vshrl.u32 %v115, 7
    %v117 = vsub.s32 0, %v116
    %v118 = vrot.slane %v113, %v117
    %v119 = vlaneseq
    %v120 = vshrl.u32 %v119, 7
    %v121 = vsub.s32 1, %v120
    %v122 = vrot.slane %v113, %v121
    %v123 = vlaneseq
    %v124 = vshrl.u32 %v123, 7
    %v125 = vsub.s32 2, %v124
    %v126 = vrot.slane %v113, %v125
    %130 = vrot.lane.b32.xlu0 %v118, 127
    %v131 = vpop.permute.xlu0 %130
    %132 = vrot.lane.b32.xlu0 %v122, 127
    %v133 = vpop.permute.xlu0 %132
    %134 = vrot.lane.b32.xlu0 %v126, 127
    %v135 = vpop.permute.xlu0 %134
    %vm136 = vcmp.lt.s32.totalorder %v38, 127
    %v137 = vsel %vm136, %v133, %v135
    %v138 = vsel %vm136, %v131, %v133
    %v139 = vsel %vm136, %v135, %v131
    %140 = vrot.lane.b32.xlu0 %v118, 126
    %v141 = vpop.permute.xlu0 %140
    %142 = vrot.lane.b32.xlu0 %v122, 126
    %v143 = vpop.permute.xlu0 %142
    %144 = vrot.lane.b32.xlu0 %v126, 126
    %v145 = vpop.permute.xlu0 %144
    %vm146 = vcmp.lt.s32.totalorder %v38, 126
    %v147 = vsel %vm146, %v143, %v145
    %v148 = vsel %vm146, %v141, %v143
    %v149 = vsel %vm146, %v145, %v141
    %v150 = vadd.s32 %v38, 128
    %v151 = vadd.s32 %v38, 256
    %vm152 = vcmp.lt.s32.totalorder %v38, 0
    %v153 = vsub.s32 0, %v38
    %v154 = vsel %vm152, %v153, %v38
    %v155 = vmul.u32.u64.compose %v154, 2863311531
    %v156 = vextract.low.u32 %v155
    %v157 = vextract.high.u32 %v155
    %v158 = vshrl.u32 %v157, 1
    %v159 = vmul.u32 %v158, 3
    %v160 = vsub.s32 %v154, %v159
    %v161 = vsub.s32 0, %v160
    %v162 = vsel %vm152, %v161, %v160
    %vm163 = vcmp.lt.s32.totalorder %v150, 0
    %v164 = vsub.s32 0, %v150
    %v165 = vsel %vm163, %v164, %v150
    %v166 = vmul.u32.u64.compose %v165, 2863311531
    %v167 = vextract.low.u32 %v166
    %v168 = vextract.high.u32 %v166
    %v169 = vshrl.u32 %v168, 1
    %v170 = vmul.u32 %v169, 3
    %v171 = vsub.s32 %v165, %v170
    %v172 = vsub.s32 0, %v171
    %v173 = vsel %vm163, %v172, %v171
    %vm174 = vcmp.lt.s32.totalorder %v151, 0
    %v175 = vsub.s32 0, %v151
    %v176 = vsel %vm174, %v175, %v151
    %v177 = vmul.u32.u64.compose %v176, 2863311531
    %v178 = vextract.low.u32 %v177
    %v179 = vextract.high.u32 %v177
    %v180 = vshrl.u32 %v179, 1
    %v181 = vmul.u32 %v180, 3
    %v182 = vsub.s32 %v176, %v181
    %v183 = vsub.s32 0, %v182
    %v184 = vsel %vm174, %v183, %v182
    %vm185 = vcmp.ne.s32.totalorder %v162, 0
    %vm186 = vcmp.ne.s32.totalorder %v173, 0
    %vm187 = vcmp.ne.s32.totalorder %v184, 0
    %vm188 = vcmp.lt.s32.totalorder %v162, 0
    %vm189 = vcmp.lt.s32.totalorder %v173, 0
    %vm190 = vcmp.lt.s32.totalorder %v184, 0
    %vm191 = vmand %vm188, %vm185
    %vm192 = vmand %vm189, %vm186
    %vm193 = vmand %vm190, %vm187
    %v194 = vadd.s32 %v162, 3
    %v195 = vadd.s32 %v173, 3
    %v196 = vadd.s32 %v184, 3
    %v197 = vsel %vm191, %v194, %v162
    %v198 = vsel %vm192, %v195, %v173
    %v199 = vsel %vm193, %v196, %v184
    %vm200 = vcmp.eq.s32.totalorder %v197, 2
    %vm201 = vcmp.eq.s32.totalorder %v198, 2
    %vm202 = vcmp.eq.s32.totalorder %v199, 2
    %vm203 = vcmp.eq.s32.totalorder %v197, 1
    %vm204 = vcmp.eq.s32.totalorder %v198, 1
    %vm205 = vcmp.eq.s32.totalorder %v199, 1
    %v206 = vsel %vm203, %v138, %v148
    %v207 = vsel %vm204, %v137, %v147
    %v208 = vsel %vm205, %v139, %v149
    %v209 = vsel %vm200, %v118, %v206
    %v210 = vsel %vm201, %v122, %v207
    %v211 = vsel %vm202, %v126, %v208
    %v215 = vcombine.low %v209, %v210
    %v217 = vunpack.c.l.s4 1966171168
    %v218 = vunpack.c.0.s8 %v217
    %v219 = vlaneseq
    %v220 = vshrl.u32 %v219, 7
    %v221 = vsub.s32 %v218, %v220
    %v222 = vrot.slane %v215, %v221
    %v224 = vunpack.c.l.s4 1966171168
    %v225 = vunpack.c.0.s8 %v224
    %v226 = vlaneseq
    %v227 = vshrl.u32 %v226, 7
    %v228 = vsub.s32 %v225, %v227
    %v229 = vrot.slane %v211, %v228
    %v230 = vcombine.low %v222, %v229
    %v232 = vunpack.c.l.s4 1966171168
    %v233 = vunpack.c.0.s8 %v232
    %v234 = vlaneseq
    %v235 = vshrl.u32 %v234, 7
    %v236 = vsub.s32 %v233, %v235
    %v237 = vrot.slane %v230, %v236
    %v239 = vmul.f32 %v13, %v237
    %v240 = vlaneseq
    %vm241 = vcmp.ge.s32.totalorder %v240, 0
    %vm242 = vcmp.lt.s32.totalorder %v240, 384
    %vm243 = vmand %vm241, %vm242
    %244 = vst.msk [vmem:[#allocation3] sm:$0x7] %vm243, %v239
    // Predicated region
    $region10: #{tpu_custom_call.1} parent=1 // pred_check
      _
    $region11: #{tpu_custom_call.1} parent=1 // pred_check_branch
      %246 = sbr.rel (0) target = $region13
    $region12: #{tpu_custom_call.1} parent=1 // pred_region
      %s248 = ssub.s32 48, 48
      %249 = vsyncadd [#allocation4], %s248
      %s251 = sshll.u32 [#allocation3], 4
      %s252 = int_to_ptr.vmem [resolvable:$true] %s251
      %254 = dma.vmem_to_hbm [thread:$0]  %s252, 48, %s2, [#allocation4]
    $region13: #{tpu_custom_call.1} parent=1 // pred_fallthru
      _
    // Predicated region
    $region14: #{tpu_custom_call.1} parent=1 // pred_check
      _
    $region15: #{tpu_custom_call.1} parent=1 // pred_check_branch
      %256 = sbr.rel (0) target = $region17
    $region16: #{tpu_custom_call.1} parent=1 // pred_region
      %257 = dma.done [#allocation4], 48
    $region17: #{tpu_custom_call.1} parent=1 // pred_fallthru
      _
    %258 = vsyncpa [#allocation4], 1

</llo_original>
